<compile_context>
chip_gen: v6e
topology: v6e:2x2x1
jax: 0.10.0
libtpu: 0.0.40
codegen_flags: <defaults>
</compile_context>

<pallas_src>
import functools
import math

import numpy as np
import jax
import jax.numpy as jnp
from jax.experimental import pallas as pl
from jax.experimental.pallas import tpu as pltpu

EPS = 1e-07


# ----------------------------- config ---------------------------------------
class Config:
    n_fft = 64
    hop_length = 16
    sr = 4000
    f_min = 0.0
    f_max = 2000.0
    n_mels = 16
    power = 2.0


def _round_up(v, m):
    return (v + m - 1) // m * m


# ----------------- deterministic parameters (numpy, built once) --------------
def _hann_window_np(n_fft):
    # torch.hann_window default: periodic=True
    n = np.arange(n_fft, dtype=np.float64)
    return 0.5 - 0.5 * np.cos(2.0 * math.pi * n / n_fft)


def _windowed_rdft_np(n_fft):
    """Real-DFT matrices with the Hann window folded in: (n_fft, n_freq) each."""
    n_freq = n_fft // 2 + 1
    win = _hann_window_np(n_fft)[:, None]
    n = np.arange(n_fft, dtype=np.float64)[:, None]
    k = np.arange(n_freq, dtype=np.float64)[None, :]
    ang = 2.0 * math.pi * n * k / n_fft
    wcos = win * np.cos(ang)
    wsin = win * (-np.sin(ang))
    return wcos, wsin


def _melscale_fbanks_np(n_freqs, f_min, f_max, n_mels, sample_rate):
    # torchaudio.functional.melscale_fbanks, mel_scale="htk", norm=None
    def hz_to_mel(f):
        return 2595.0 * np.log10(1.0 + f / 700.0)

    def mel_to_hz(m):
        return 700.0 * (10.0 ** (m / 2595.0) - 1.0)

    all_freqs = np.linspace(0.0, sample_rate / 2.0, n_freqs)
    m_pts = np.linspace(hz_to_mel(f_min), hz_to_mel(f_max), n_mels + 2)
    f_pts = mel_to_hz(m_pts)
    f_diff = f_pts[1:] - f_pts[:-1]
    slopes = f_pts[None, :] - all_freqs[:, None]
    down = (-1.0 * slopes[:, :-2]) / f_diff[:-1]
    up = slopes[:, 2:] / f_diff[1:]
    return np.maximum(0.0, np.minimum(down, up))          # (n_freqs, n_mels)


# ------------------------------ Pallas kernels --------------------------------
def _frontend_kernel_p2(frames_ref, dft_ref, fb_ref, out_ref):
    """power == 2.0 fast path.

    frames_ref: (n_fft, tile_t)      time on lanes
    dft_ref:    (k_pack, n_fft)      windowed cos rows [0,n_freq), -sin rows [half, half+n_freq)
    fb_ref:     (n_mels_pad, k_pack) fb^T duplicated at the cos cols and sin cols
    out_ref:    (n_mels_pad, tile_t) lane-dense log-mel (already (mel, time) layout)
    """
    y = jnp.dot(dft_ref[...], frames_ref[...], preferred_element_type=jnp.float32)
    y2 = (y * y).astype(fb_ref.dtype)
    # |X|^2 = re^2 + im^2 rides the mel matmul via the duplicated filterbank.
    mel = jnp.dot(fb_ref[...], y2, preferred_element_type=jnp.float32)
    out_ref[...] = jnp.log(mel + EPS)


def _frontend_kernel_gen(frames_ref, dft_ref, fb_ref, out_ref, *, power, half):
    """General power path (power == 1.0 or arbitrary positive power)."""
    y = jnp.dot(dft_ref[...], frames_ref[...], preferred_element_type=jnp.float32)
    y2 = y * y
    # Sublane-aligned split+add: rows [0, n_freq) of mag2 hold re^2 + im^2.
    mag2 = y2[:half, :] + y2[half:, :]
    if power == 1.0:
        spec = jnp.sqrt(mag2)
    else:
        spec = jnp.power(mag2, power * 0.5)
    mel = jnp.dot(fb_ref[...], spec.astype(fb_ref.dtype),
                  preferred_element_type=jnp.float32)
    out_ref[...] = jnp.log(mel + EPS)


# ------------------------------ wrapper factory --------------------------------
def make_frontend(config, compute_dtype=jnp.bfloat16):
    """Build a jitted frontend(x, y) -> (log-mel (batch, n_mels, time), y, -1)."""
    if config.power is None:
        # TODO(synk): power=None (complex spectrogram passthrough) has no real
        # MelScale semantics; not implemented in-kernel.
        raise NotImplementedError("power=None (complex spectrogram) is not supported")

    n_fft = int(config.n_fft)
    hop = int(config.hop_length)
    n_freq = n_fft // 2 + 1
    n_mels = int(config.n_mels)
    n_mels_pad = _round_up(n_mels, 8)
    half = _round_up(n_freq, 8)
    k_pack = 2 * half
    power = float(config.power)
    pad = n_fft // 2

    # Constants built once with numpy (hoisted out of the per-call path).
    wcos, wsin = _windowed_rdft_np(n_fft)                  # (n_fft, n_freq)
    fb = _melscale_fbanks_np(n_freq, float(config.f_min), float(config.f_max),
                             n_mels, float(config.sr))     # (n_freq, n_mels)

    dft = np.zeros((k_pack, n_fft), np.float64)
    dft[:n_freq, :] = wcos.T
    dft[half:half + n_freq, :] = wsin.T

    if power == 2.0:
        fbm = np.zeros((n_mels_pad, k_pack), np.float64)
        fbm[:n_mels, :n_freq] = fb.T
        fbm[:n_mels, half:half + n_freq] = fb.T
        kernel = _frontend_kernel_p2
    else:
        fbm = np.zeros((n_mels_pad, half), np.float64)
        fbm[:n_mels, :n_freq] = fb.T
        kernel = functools.partial(_frontend_kernel_gen, power=power, half=half)
    fb_cols = fbm.shape[1]

    dft_dev = jnp.asarray(dft, dtype=compute_dtype)
    fb_dev = jnp.asarray(fbm, dtype=compute_dtype)

    @jax.jit
    def _run(x):
        batch, n_samples = x.shape
        if n_samples <= pad:
            raise ValueError("reflect padding requires num_samples > n_fft // 2")
        x32 = x.astype(jnp.float32)
        n_frames = 1 + n_samples // hop

        # center (reflect) padding + framing, transposed: frames[b, n, t] = xp[b, t*hop + n]
        # TODO(synk): for long audio, assemble frames in-kernel from the padded
        # waveform (overlapping windows via manual DMA) to avoid the n_fft/hop x
        # HBM read amplification of materializing overlapping frames.
        xp = jnp.pad(x32, ((0, 0), (pad, pad)), mode="reflect")
        idx = (np.arange(n_fft, dtype=np.int32)[:, None]
               + hop * np.arange(n_frames, dtype=np.int32)[None, :])
        frames = jnp.take(xp, jnp.asarray(idx), axis=1).astype(compute_dtype)

        # Lane-dense time tiling (multiple of 128, up to 2048 lanes); keep >= 2 grid
        # steps when batch == 1 so both v7x TensorCores get work.
        n_frames_128 = _round_up(n_frames, 128)
        n_tiles = -(-n_frames_128 // 2048)
        if batch == 1 and n_tiles == 1 and n_frames_128 >= 256:
            n_tiles = 2
        tile_t = _round_up(-(-n_frames_128 // n_tiles), 128)
        n_frames_pad = tile_t * n_tiles
        if n_frames_pad > n_frames:
            frames = jnp.pad(frames, ((0, 0), (0, 0), (0, n_frames_pad - n_frames)))

        grid = (batch, n_tiles)
        item = jnp.dtype(compute_dtype).itemsize
        flops = 2 * batch * n_frames_pad * (k_pack * n_fft + n_mels_pad * fb_cols)
        bytes_accessed = (batch * n_fft * n_frames_pad * item
                          + batch * n_mels_pad * n_frames_pad * 4
                          + dft_dev.size * item + fb_dev.size * item)
        transcendentals = batch * n_mels_pad * n_frames_pad

        out = pl.pallas_call(
            kernel,
            out_shape=jax.ShapeDtypeStruct((batch, n_mels_pad, n_frames_pad),
                                           jnp.float32),
            grid_spec=pltpu.PrefetchScalarGridSpec(
                num_scalar_prefetch=0,
                grid=grid,
                in_specs=[
                    pl.BlockSpec((None, n_fft, tile_t), lambda b, t: (b, 0, t)),
                    pl.BlockSpec((k_pack, n_fft), lambda b, t: (0, 0)),
                    pl.BlockSpec((n_mels_pad, fb_cols), lambda b, t: (0, 0)),
                ],
                out_specs=pl.BlockSpec((None, n_mels_pad, tile_t),
                                       lambda b, t: (b, 0, t)),
            ),
            compiler_params=pltpu.CompilerParams(
                dimension_semantics=("parallel", "parallel")),
            cost_estimate=pl.CostEstimate(flops=flops,
                                          transcendentals=transcendentals,
                                          bytes_accessed=bytes_accessed),
        )(frames, dft_dev, fb_dev)

        # Kernel already emits (batch, n_mels_pad, time); just strip the padding.
        return out[:, :n_mels, :n_frames]

    def frontend(x, y):
        mel_log = _run(x)
        ts_rate = -1
        return mel_log, y, ts_rate

    return frontend


# ------------------------------ main ------------------------------------------
if __name__ == "__main__":
    cfg = Config()
    key = jax.random.PRNGKey(0)
    kx, ky = jax.random.split(key)
    batch, n_samples = 2, 256
    x = jax.random.normal(kx, (batch, n_samples), dtype=jnp.float32)
    y = jax.random.randint(ky, (batch,), 0, 10)

    frontend_bf16 = make_frontend(cfg, compute_dtype=jnp.bfloat16)   # perf default
    frontend_f32 = make_frontend(cfg, compute_dtype=jnp.float32)     # precision mode
    cfg_p1 = Config()
    cfg_p1.power = 1.0
    frontend_p1 = make_frontend(cfg_p1, compute_dtype=jnp.float32)   # general-power path

    mel_bf16, y_out, ts_rate = frontend_bf16(x, y)
    mel_f32, _, _ = frontend_f32(x, y)
    mel_p1, _, _ = frontend_p1(x, y)
    jax.block_until_ready((mel_bf16, mel_f32, mel_p1))

    n_frames = 1 + n_samples // cfg.hop_length
    assert mel_bf16.shape == (batch, cfg.n_mels, n_frames), mel_bf16.shape
    assert mel_f32.shape == (batch, cfg.n_mels, n_frames), mel_f32.shape
    assert mel_bf16.dtype == jnp.float32
    assert ts_rate == -1
    assert bool(jnp.all(y_out == y))
    assert bool(jnp.all(jnp.isfinite(mel_bf16)))
    assert bool(jnp.all(jnp.isfinite(mel_p1)))

    # Pure-JAX reference (f32, high-precision matmuls).
    pad = cfg.n_fft // 2
    xp = jnp.pad(x, ((0, 0), (pad, pad)), mode="reflect")
    idx = (np.arange(n_frames)[:, None] * cfg.hop_length
           + np.arange(cfg.n_fft)[None, :])
    frames_ref = xp[:, jnp.asarray(idx)].astype(jnp.float32)           # (batch, T, n_fft)
    wcos_r, wsin_r = _windowed_rdft_np(cfg.n_fft)
    fb_r = _melscale_fbanks_np(cfg.n_fft // 2 + 1, cfg.f_min, cfg.f_max,
                               cfg.n_mels, cfg.sr)
    wcos_j = jnp.asarray(wcos_r, jnp.float32)
    wsin_j = jnp.asarray(wsin_r, jnp.float32)
    fb_j = jnp.asarray(fb_r, jnp.float32)
    hi = jax.lax.Precision.HIGHEST
    re = jnp.einsum("btn,nf->btf", frames_ref, wcos_j, precision=hi)
    im = jnp.einsum("btn,nf->btf", frames_ref, wsin_j, precision=hi)
    mag2 = re * re + im * im
    ref_p2 = jnp.transpose(
        jnp.log(jnp.einsum("btf,fm->btm", mag2, fb_j, precision=hi) + EPS), (0, 2, 1))
    ref_p1 = jnp.transpose(
        jnp.log(jnp.einsum("btf,fm->btm", jnp.sqrt(mag2), fb_j, precision=hi) + EPS),
        (0, 2, 1))

    err_f32 = float(jnp.max(jnp.abs(mel_f32 - ref_p2)))
    err_bf16 = float(jnp.max(jnp.abs(mel_bf16 - ref_p2)))
    err_p1 = float(jnp.max(jnp.abs(mel_p1 - ref_p1)))
    assert err_f32 < 5e-2, err_f32
    assert err_p1 < 5e-2, err_p1
    assert err_bf16 < 1.5e-1, err_bf16

    print("KERNEL_OK")
</pallas_src>

<mosaic_0001>
module attributes {stable_mosaic.version = 11 : i64} {
  func.func @_frontend_kernel_p2(%arg0: i32, %arg1: i32, %arg2: memref<1x64x128xbf16, #tpu.memory_space<vmem>>, %arg3: memref<80x64xbf16, #tpu.memory_space<vmem>>, %arg4: memref<16x80xbf16, #tpu.memory_space<vmem>>, %arg5: memref<1x16x128xf32, #tpu.memory_space<vmem>>) attributes {dimension_semantics = [#tpu.dimension_semantics<parallel>, #tpu.dimension_semantics<parallel>], iteration_bounds = array<i64: 2, 1>, scalar_prefetch = 0 : i64, scratch_operands = 0 : i64, tpu.core_type = #tpu.core_type<tc>, window_params = [{transform_indices = @transform_0, window_bounds = array<i64: 1, 64, 128>}, {pipeline_mode = #tpu.pipeline_mode<synchronous>, transform_indices = @transform_1, window_bounds = array<i64: 80, 64>}, {pipeline_mode = #tpu.pipeline_mode<synchronous>, transform_indices = @transform_2, window_bounds = array<i64: 16, 80>}, {transform_indices = @transform_3, window_bounds = array<i64: 1, 16, 128>}]} {
    %c0 = arith.constant 0 : index
    %c0_0 = arith.constant 0 : index
    %0 = vector.load %arg3[%c0, %c0_0] : memref<80x64xbf16, #tpu.memory_space<vmem>>, vector<80x64xbf16>
    %c0_1 = arith.constant 0 : index
    %c0_2 = arith.constant 0 : index
    %c0_3 = arith.constant 0 : index
    %1 = vector.load %arg2[%c0_1, %c0_2, %c0_3] : memref<1x64x128xbf16, #tpu.memory_space<vmem>>, vector<1x64x128xbf16>
    %2 = vector.shape_cast %1 : vector<1x64x128xbf16> to vector<64x128xbf16>
    %cst = arith.constant dense<0.000000e+00> : vector<80x128xf32>
    %3 = tpu.matmul %0, %2, %cst {dimension_numbers = #tpu.dot_dimension_numbers<[1], [0], [0], [1], [0, 0, 1, 1], [], []>} : vector<80x64xbf16>, vector<64x128xbf16>, vector<80x128xf32> -> vector<80x128xf32>
    %4 = arith.mulf %3, %3 : vector<80x128xf32>
    %5 = arith.truncf %4 : vector<80x128xf32> to vector<80x128xbf16>
    %c0_4 = arith.constant 0 : index
    %c0_5 = arith.constant 0 : index
    %6 = vector.load %arg4[%c0_4, %c0_5] : memref<16x80xbf16, #tpu.memory_space<vmem>>, vector<16x80xbf16>
    %cst_6 = arith.constant dense<0.000000e+00> : vector<16x128xf32>
    %7 = tpu.matmul %6, %5, %cst_6 {dimension_numbers = #tpu.dot_dimension_numbers<[1], [0], [0], [1], [0, 0, 1, 1], [], []>} : vector<16x80xbf16>, vector<80x128xbf16>, vector<16x128xf32> -> vector<16x128xf32>
    %cst_7 = arith.constant 1.000000e-07 : f32
    %8 = vector.broadcast %cst_7 : f32 to vector<16x128xf32>
    %9 = arith.addf %7, %8 : vector<16x128xf32>
    %10 = math.log %9 : vector<16x128xf32>
    %c0_8 = arith.constant 0 : index
    %c0_9 = arith.constant 0 : index
    %c0_10 = arith.constant 0 : index
    %11 = vector.load %arg5[%c0_8, %c0_9, %c0_10] : memref<1x16x128xf32, #tpu.memory_space<vmem>>, vector<1x16x128xf32>
    %12 = vector.shape_cast %11 : vector<1x16x128xf32> to vector<16x128xf32>
    %13 = vector.shape_cast %10 : vector<16x128xf32> to vector<1x16x128xf32>
    tpu.vector_store %arg5[%c0_8, %c0_9, %c0_10], %13 {strides = array<i32>} : memref<1x16x128xf32, #tpu.memory_space<vmem>>, vector<1x16x128xf32>,
    return
  }
  func.func @transform_0(%arg0: i32, %arg1: i32) -> (i32, i32, i32) {
    %c0_i32 = arith.constant 0 : i32
    %c0_i32_0 = arith.constant 0 : i32
    return %arg0, %c0_i32, %arg1 : i32, i32, i32
  }
  func.func @transform_1(%arg0: i32, %arg1: i32) -> (i32, i32) {
    %c0_i32 = arith.constant 0 : i32
    %c0_i32_0 = arith.constant 0 : i32
    %c0_i32_1 = arith.constant 0 : i32
    return %c0_i32, %c0_i32_0 : i32, i32
  }
  func.func @transform_2(%arg0: i32, %arg1: i32) -> (i32, i32) {
    %c0_i32 = arith.constant 0 : i32
    %c0_i32_0 = arith.constant 0 : i32
    %c0_i32_1 = arith.constant 0 : i32
    return %c0_i32, %c0_i32_0 : i32, i32
  }
  func.func @transform_3(%arg0: i32, %arg1: i32) -> (i32, i32, i32) {
    %c0_i32 = arith.constant 0 : i32
    %c0_i32_0 = arith.constant 0 : i32
    return %arg0, %c0_i32, %arg1 : i32, i32, i32
  }
}

</mosaic_0001>

<llo_original>
// kernel: _run.1
$region0: #{_run.1}
  #allocation0 [shape = 'u32[]', space=smem, size = 0x4, offset = 0x4, fixed_abs, tag = 'smem constant byte address 0x4 - core index']
  #allocation1 [shape = 'u32[144,128]{1,0:T(1,128)}', space=vmem, size = 0x12000, scoped, tag = 'internal scratch']
  %s0 = inlined_call_operand.vmem [shape: bf16[2,64,128], index: 0, kind: input, shape index: {}]
  %s1 = inlined_call_operand.vmem [shape: bf16[80,64], index: 1, kind: input, shape index: {}]
  %s2 = inlined_call_operand.vmem [shape: bf16[16,80], index: 2, kind: input, shape index: {}]
  %s3 = inlined_call_operand.hbm [shape: f32[2,16,128], index: 3, kind: output, shape index: {}]
  %s4 = sld [smem:[#allocation0]]
  $region45: #{_run.1} parent=0
    _
  %s6 = ssub.s32 1, %s4
  %s7 = scalar_select 0, %s6, %s4
  $region1: #{_run.1} parent=0
    #allocation2 [shape = 'u8[16384]{0}', space=vmem, size = 0x4000, scoped, tag = 'output window, operand 0']
    #allocation3 [shape = 's32[2]{0}', space=sflag, size = 0x8, scoped, tag = 'scoped memory for _run.1']
    %8 = vsyncpa [#allocation3], 0
    %s9 = scalar_lea.sflag [#allocation3], 1
    %10 = vsyncpa %s9, 0
    loop: start=0, step=1, limit=4
    $region2: #{_run.1} parent=1 // loop_pre_header
      _
    $region3: #{_run.1} parent=1 // loop_header
      %s12 = sphi 0, %s16
      %p13 = scmp.ge.s32.totalorder %s12, 4
      %s19 = sphi 0, %s31
      %s20 = sphi 0, %s27
      %s21 = sphi 0, %s19
      %s22 = sphi 0, %s20
      %s23 = sphi 0, %s21
      %s24 = sphi 0, %s22
      %s36 = sphi 0, %s38
      %s39 = sphi 0, %s36
      %s40 = sphi 0, %s39
      %s56 = sphi 0, %s40
      %s60 = sphi 0, %s60
      %s62 = sphi 0, %s60
      %s63 = sphi 0, %s62
      %s77 = sphi 0, %s63
      %s81 = sphi 0, %s81
      %s83 = sphi 0, %s81
      %s84 = sphi 0, %s83
      %s98 = sphi 0, %s84
      %s106 = sphi 0, %s108
      %s109 = sphi 0, %s106
      %s110 = sphi 0, %s109
      %s126 = sphi 0, %s110
    $region4: #{_run.1} parent=1 // loop_header_branch
      %15 = sbr.rel (%p13) target = $region8
    $region5: #{_run.1} parent=1 // loop_body
      %s17 = ssub.s32 %s12, 1
      %s18 = ssub.s32 %s12, 2
      %s25 = sadd.s32 1, %s20
      %p26 = scmp.ge.s32.totalorder %s25, 1
      %s27 = scalar_select %p26, 0, %s25
      %s28 = sadd.s32 1, %s19
      %s29 = scalar_select %p26, %s28, %s19
      %p30 = scmp.ge.s32.totalorder %s29, 2
      %s31 = scalar_select %p30, 0, %s29
      %s32 = ssub.s32 %s19, %s31
      %s33 = ssub.s32 %s20, %s27
      %s34 = sor.u32 %s32, %s33
      %p35 = scmp.eq.s32.totalorder %s34, 0
      %s37 = sadd.s32 %s36, 1
      %s38 = scalar_select %p35, %s36, %s37
      %p41 = pneg %p35
      %p42 = scmp.eq.s32.totalorder %s12, 1
      %p43 = por %p41, %p42
      %p44 = scmp.ne.s32.totalorder %s36, %s39
      %p45 = scmp.eq.s32.totalorder %s12, 0
      %p46 = por %p44, %p45
      %p47 = scmp.ne.s32.totalorder %s36, %s39
      %p48 = scmp.eq.s32.totalorder %s17, 1
      %p49 = por %p47, %p48
      %p50 = scmp.ne.s32.totalorder %s39, %s40
      %p51 = scmp.eq.s32.totalorder %s17, 0
      %p52 = por %p50, %p51
      %p53 = scmp.ne.s32.totalorder %s39, %s40
      %p54 = scmp.eq.s32.totalorder %s18, 1
      %p55 = por %p53, %p54
      %p57 = scmp.ne.s32.totalorder %s40, %s56
      %p58 = scmp.eq.s32.totalorder %s18, 0
      %p59 = por %p57, %p58
      %s61 = sadd.s32 %s60, 1
      %p64 = scmp.eq.s32.totalorder %s12, 1
      %p65 = scmp.ne.s32.totalorder %s60, %s62
      %p66 = scmp.eq.s32.totalorder %s12, 0
      %p67 = por %p65, %p66
      %p68 = scmp.ne.s32.totalorder %s60, %s62
      %p69 = scmp.eq.s32.totalorder %s17, 1
      %p70 = por %p68, %p69
      %p71 = scmp.ne.s32.totalorder %s62, %s63
      %p72 = scmp.eq.s32.totalorder %s17, 0
      %p73 = por %p71, %p72
      %p74 = scmp.ne.s32.totalorder %s62, %s63
      %p75 = scmp.eq.s32.totalorder %s18, 1
      %p76 = por %p74, %p75
      %p78 = scmp.ne.s32.totalorder %s63, %s77
      %p79 = scmp.eq.s32.totalorder %s18, 0
      %p80 = por %p78, %p79
      %s82 = sadd.s32 %s81, 1
      %p85 = scmp.eq.s32.totalorder %s12, 1
      %p86 = scmp.ne.s32.totalorder %s81, %s83
      %p87 = scmp.eq.s32.totalorder %s12, 0
      %p88 = por %p86, %p87
      %p89 = scmp.ne.s32.totalorder %s81, %s83
      %p90 = scmp.eq.s32.totalorder %s17, 1
      %p91 = por %p89, %p90
      %p92 = scmp.ne.s32.totalorder %s83, %s84
      %p93 = scmp.eq.s32.totalorder %s17, 0
      %p94 = por %p92, %p93
      %p95 = scmp.ne.s32.totalorder %s83, %s84
      %p96 = scmp.eq.s32.totalorder %s18, 1
      %p97 = por %p95, %p96
      %p99 = scmp.ne.s32.totalorder %s84, %s98
      %p100 = scmp.eq.s32.totalorder %s18, 0
      %p101 = por %p99, %p100
      %s102 = ssub.s32 %s19, %s31
      %s103 = ssub.s32 %s20, %s27
      %s104 = sor.u32 %s102, %s103
      %p105 = scmp.eq.s32.totalorder %s104, 0
      %s107 = sadd.s32 %s106, 1
      %s108 = scalar_select %p105, %s106, %s107
      %p111 = pneg %p105
      %p112 = scmp.eq.s32.totalorder %s12, 1
      %p113 = por %p111, %p112
      %p114 = scmp.ne.s32.totalorder %s106, %s109
      %p115 = scmp.eq.s32.totalorder %s12, 0
      %p116 = por %p114, %p115
      %p117 = scmp.ne.s32.totalorder %s106, %s109
      %p118 = scmp.eq.s32.totalorder %s17, 1
      %p119 = por %p117, %p118
      %p120 = scmp.ne.s32.totalorder %s109, %s110
      %p121 = scmp.eq.s32.totalorder %s17, 0
      %p122 = por %p120, %p121
      %p123 = scmp.ne.s32.totalorder %s109, %s110
      %p124 = scmp.eq.s32.totalorder %s18, 1
      %p125 = por %p123, %p124
      %p127 = scmp.ne.s32.totalorder %s110, %s126
      %p128 = scmp.eq.s32.totalorder %s18, 0
      %p129 = por %p127, %p128
      %p130 = scmp.le.s32.totalorder 1, %s12
      %p131 = scmp.lt.s32.totalorder %s12, 3
      %p132 = pnand %p130, %p131
      %p133 = pneg %p132
      // Predicated region
      $region9: #{_run.1} parent=5 // pred_check
        _
      $region10: #{_run.1} parent=5 // pred_check_branch
        %135 = sbr.rel (%p132) target = $region12
      $region11: #{_run.1} parent=5 // pred_region
        %s136 = ssub.s32 %s12, 1
        // Predicated region
        $region13: #{_run.1} parent=11 // pred_check
          %p137 = pneg %p73
        $region14: #{_run.1} parent=11 // pred_check_branch
          %139 = sbr.rel (%p137) target = $region16
        $region15: #{_run.1} parent=11 // pred_region
          _
        $region16: #{_run.1} parent=11 // pred_fallthru
          _
        // Predicated region
        $region17: #{_run.1} parent=11 // pred_check
          %p140 = pneg %p94
        $region18: #{_run.1} parent=11 // pred_check_branch
          %142 = sbr.rel (%p140) target = $region20
        $region19: #{_run.1} parent=11 // pred_region
          _
        $region20: #{_run.1} parent=11 // pred_fallthru
          _
      $region12: #{_run.1} parent=5 // pred_fallthru
        _
      %p143 = scmp.lt.s32.totalorder %s12, 2
      // Predicated region
      $region21: #{_run.1} parent=5 // pred_check
        %p144 = pneg %p143
      $region22: #{_run.1} parent=5 // pred_check_branch
        %146 = sbr.rel (%p144) target = $region24
      $region23: #{_run.1} parent=5 // pred_region
        // Predicated region
        $region25: #{_run.1} parent=23 // pred_check
          %p147 = pneg %p46
        $region26: #{_run.1} parent=23 // pred_check_branch
          %149 = sbr.rel (%p147) target = $region28
        $region27: #{_run.1} parent=23 // pred_region
          %p150 = scmp.lt.s32.totalorder %s19, 1
          %s151 = scalar_select %p150, %s19, 1
          %p152 = scmp.lt.s32.totalorder %s20, 0
          %s153 = scalar_select %p152, %s20, 0
          %s154 = smul.addr %s151, 8
          %s155 = sadd.s32 %s153, %s154
          %s156 = smul.addr %s155, 4
          %s157 = scalar_lea.vmem %s0, %s156
        $region28: #{_run.1} parent=23 // pred_fallthru
          _
      $region24: #{_run.1} parent=5 // pred_fallthru
        _
      %p158 = scmp.le.s32.totalorder 1, %s12
      %p159 = scmp.lt.s32.totalorder %s12, 3
      %p160 = pnand %p158, %p159
      %p161 = pneg %p160
      // Predicated region
      $region29: #{_run.1} parent=5 // pred_check
        _
      $region30: #{_run.1} parent=5 // pred_check_branch
        %163 = sbr.rel (%p160) target = $region32
      $region31: #{_run.1} parent=5 // pred_region
        %s164 = ssub.s32 %s12, 1
        %p165 = scmp.lt.s32.totalorder %s21, 1
        %s166 = scalar_select %p165, %s21, 1
        %p167 = scmp.lt.s32.totalorder %s22, 0
        %s168 = scalar_select %p167, %s22, 0
        %s169 = smul.addr %s166, 8
        %s170 = sadd.s32 %s168, %s169
        %s171 = smul.addr %s170, 4
        %s172 = scalar_lea.vmem %s0, %s171
        %p173 = pneg %p52
        %p174 = pneg %p49
        %p175 = pneg %p73
        %p176 = pneg %p70
        %p177 = pneg %p94
        %p178 = pneg %p91
        %p179 = pneg %p122
        %p180 = pneg %p119
        %s181 = sand.u32 %s109, 1
        %s182 = scalar_lea.sflag [#allocation3], %s181
        %s183 = sand.u32 %s109, 1
        %s184 = smul.addr %s183, 16
        %s185 = scalar_lea.vmem [#allocation2], %s184
        %p186 = scmp.lt.s32.totalorder %s21, 1
        %s187 = scalar_select %p186, %s21, 1
        %p188 = scmp.lt.s32.totalorder %s22, 0
        %s189 = scalar_select %p188, %s22, 0
        %s190 = smul.addr %s187, 8
        %s191 = sadd.s32 %s189, %s190
        %s192 = smul.addr %s191, 4
        %s193 = scalar_lea.vmem %s0, %s192
        %v195 = vld [vmem:[%s1] sm:$0xf]
        %v196 = vld [vmem:[%s1 + $0x4] sm:$0xf]
        %v197 = vld [vmem:[%s1 + $0x8] sm:$0xf]
        %v198 = vld [vmem:[%s1 + $0xc] sm:$0xf]
        %v199 = vld [vmem:[%s1 + $0x10] sm:$0xf]
        %v200 = vld [vmem:[%s1 + $0x14] sm:$0xf]
        %v201 = vld [vmem:[%s1 + $0x18] sm:$0xf]
        %v202 = vld [vmem:[%s1 + $0x1c] sm:$0xf]
        %v203 = vld [vmem:[%s1 + $0x20] sm:$0xf]
        %v204 = vld [vmem:[%s1 + $0x24] sm:$0xf]
        %v205 = vld [vmem:[%s193] sm:$0xf]
        %v206 = vld [vmem:[%s193 + $0x4] sm:$0xf]
        %v207 = vld [vmem:[%s193 + $0x8] sm:$0xf]
        %v208 = vld [vmem:[%s193 + $0xc] sm:$0xf]
        %v209 = vld [vmem:[%s193 + $0x10] sm:$0xf]
        %v210 = vld [vmem:[%s193 + $0x14] sm:$0xf]
        %v211 = vld [vmem:[%s193 + $0x18] sm:$0xf]
        %v212 = vld [vmem:[%s193 + $0x1c] sm:$0xf]
        %v223 = vunpack.c.l.b16 %v195
        %v224 = vunpack.c.l.b16 %v196
        %v225 = vunpack.c.l.b16 %v197
        %v226 = vunpack.c.l.b16 %v198
        %v227 = vunpack.c.l.b16 %v199
        %v228 = vunpack.c.l.b16 %v200
        %v229 = vunpack.c.l.b16 %v201
        %v230 = vunpack.c.l.b16 %v202
        %v231 = vunpack.c.l.b16 %v203
        %v232 = vunpack.c.l.b16 %v204
        %v233 = vpack.c.b16 %v224, %v223
        %v234 = vpack.c.b16 %v226, %v225
        %v235 = vpack.c.b16 %v228, %v227
        %v236 = vpack.c.b16 %v230, %v229
        %v237 = vpack.c.b16 %v232, %v231
        %v246 = vunpack.c.l.b16 %v205
        %v247 = vunpack.c.l.b16 %v206
        %v248 = vunpack.c.l.b16 %v207
        %v249 = vunpack.c.l.b16 %v208
        %v250 = vunpack.c.l.b16 %v209
        %v251 = vunpack.c.l.b16 %v210
        %v252 = vunpack.c.l.b16 %v211
        %v253 = vunpack.c.l.b16 %v212
        %v254 = vpack.c.b16 %v247, %v246
        %v255 = vpack.c.b16 %v249, %v248
        %v256 = vpack.c.b16 %v251, %v250
        %v257 = vpack.c.b16 %v253, %v252
        %vm262 = vcmask 523264
        %v264 = vsel %vm262, %v233, 0
        %v267 = vsel %vm262, %v234, 0
        %v270 = vsel %vm262, %v235, 0
        %v273 = vsel %vm262, %v236, 0
        %v276 = vsel %vm262, %v237, 0
        %278 = vmatprep.subr.bf16.mxu0 0
        %279 = vmatpush1.bf16.msra.mxu0 0
        %280 = vmatprep.subr.bf16.mxu0 0
        %281 = vmatpush1.bf16.msra.mxu0 0
        %282 = vmatprep.subr.bf16.mxu0 0
        %283 = vmatpush1.bf16.msra.mxu0 0
        %284 = vmatprep.subr.bf16.mxu0 0
        %285 = vmatpush1.bf16.msra.mxu0 0
        %286 = vmatprep.subr.bf16.mxu0 0
        %287 = vmatpush1.bf16.msra.mxu0 %v257
        %288 = vmatprep.subr.bf16.mxu0 0
        %289 = vmatpush1.bf16.msra.mxu0 %v256
        %290 = vmatprep.subr.bf16.mxu0 0
        %291 = vmatpush1.bf16.msra.mxu0 %v255
        %292 = vmatprep.subr.bf16.mxu0 0
        %293 = vmatpush1.bf16.msra.mxu0 %v254
        %294 = vmatprep.subr.bf16.mxu0 0
        %295 = vmatpush2.bf16.msra.mxu0 0
        %296 = vmatprep.subr.bf16.mxu0 0
        %297 = vmatpush2.bf16.msra.mxu0 0
        %298 = vmatprep.subr.bf16.mxu0 0
        %299 = vmatpush2.bf16.msra.mxu0 0
        %300 = vmatprep.subr.bf16.mxu0 0
        %301 = vmatpush2.bf16.msra.mxu0 0
        %302 = vmatprep.subr.bf16.mxu0 0
        %303 = vmatpush2.bf16.msra.mxu0 0
        %304 = vmatprep.subr.bf16.mxu0 0
        %305 = vmatpush2.bf16.msra.mxu0 0
        %306 = vmatprep.subr.bf16.mxu0 0
        %307 = vmatpush2.bf16.msra.mxu0 0
        %308 = vmatprep.subr.bf16.mxu0 0
        %309 = vmatpush2.bf16.msra.mxu0 0
        %310 = vmatprep.mubr.bf16.mxu0 0
        %311 = vmatmul.mubr.bf16.gmra.mxu0 %v264
        %v312 = vpop.f32.mrf.mxu0
        %v313 = vadd.f32 0.0, %v312
        %v314 = vpop.f32.mrf.mxu0
        %v315 = vpop.f32.mrf.mxu0
        %v316 = vadd.f32 0.0, %v315
        %v317 = vpop.f32.mrf.mxu0
        %318 = vmatprep.mubr.bf16.mxu0 0
        %319 = vmatmul.mubr.bf16.gmra.mxu0 %v267
        %v320 = vpop.f32.mrf.mxu0
        %v321 = vadd.f32 0.0, %v320
        %v322 = vpop.f32.mrf.mxu0
        %v323 = vpop.f32.mrf.mxu0
        %v324 = vadd.f32 0.0, %v323
        %v325 = vpop.f32.mrf.mxu0
        %326 = vmatprep.mubr.bf16.mxu0 0
        %327 = vmatmul.mubr.bf16.gmra.mxu0 %v270
        %v328 = vpop.f32.mrf.mxu0
        %v329 = vadd.f32 0.0, %v328
        %v330 = vpop.f32.mrf.mxu0
        %v331 = vpop.f32.mrf.mxu0
        %v332 = vadd.f32 0.0, %v331
        %v333 = vpop.f32.mrf.mxu0
        %334 = vmatprep.mubr.bf16.mxu0 0
        %335 = vmatmul.mubr.bf16.gmra.mxu0 %v273
        %v336 = vpop.f32.mrf.mxu0
        %v337 = vadd.f32 0.0, %v336
        %v338 = vpop.f32.mrf.mxu0
        %v339 = vpop.f32.mrf.mxu0
        %v340 = vadd.f32 0.0, %v339
        %v341 = vpop.f32.mrf.mxu0
        %342 = vmatprep.mubr.bf16.mxu0 0
        %343 = vmatmul.mubr.bf16.gmra.mxu0 %v276
        %v344 = vpop.f32.mrf.mxu0
        %v345 = vadd.f32 0.0, %v344
        %v346 = vpop.f32.mrf.mxu0
        %v347 = vpop.f32.mrf.mxu0
        %v348 = vadd.f32 0.0, %v347
        %v349 = vpop.f32.mrf.mxu0
        %350 = vdwg.mxu0
        %v351 = vmul.f32 %v313, %v313
        %v352 = vmul.f32 %v316, %v316
        %v353 = vmul.f32 %v321, %v321
        %v354 = vmul.f32 %v324, %v324
        %v355 = vmul.f32 %v329, %v329
        %v356 = vmul.f32 %v332, %v332
        %v357 = vmul.f32 %v337, %v337
        %v358 = vmul.f32 %v340, %v340
        %v359 = vmul.f32 %v345, %v345
        %v360 = vmul.f32 %v348, %v348
        %v361 = vpack.c.bf16 %v352, %v351
        %v362 = vpack.c.bf16 %v354, %v353
        %v363 = vpack.c.bf16 %v356, %v355
        %v364 = vpack.c.bf16 %v358, %v357
        %v365 = vpack.c.bf16 %v360, %v359
        %v366 = vld [vmem:[%s2] sm:$0xf]
        %v367 = vld [vmem:[%s2 + $0x4] sm:$0xf]
        %v370 = vunpack.c.l.b16 %v366
        %v371 = vunpack.c.l.b16 %v367
        %v372 = vpack.c.b16 %v371, %v370
        %vm373 = vcmask 654336
        %v375 = vsel %vm373, %v372, 0
        %377 = vmatprep.subr.bf16.mxu0 0
        %378 = vmatpush1.bf16.msra.mxu0 0
        %379 = vmatprep.subr.bf16.mxu0 0
        %380 = vmatpush1.bf16.msra.mxu0 0
        %381 = vmatprep.subr.bf16.mxu0 0
        %382 = vmatpush1.bf16.msra.mxu0 0
        %383 = vmatprep.subr.bf16.mxu0 0
        %384 = vmatpush1.bf16.msra.mxu0 %v365
        %385 = vmatprep.subr.bf16.mxu0 0
        %386 = vmatpush1.bf16.msra.mxu0 %v364
        %387 = vmatprep.subr.bf16.mxu0 0
        %388 = vmatpush1.bf16.msra.mxu0 %v363
        %389 = vmatprep.subr.bf16.mxu0 0
        %390 = vmatpush1.bf16.msra.mxu0 %v362
        %391 = vmatprep.subr.bf16.mxu0 0
        %392 = vmatpush1.bf16.msra.mxu0 %v361
        %393 = vmatprep.subr.bf16.mxu0 0
        %394 = vmatpush2.bf16.msra.mxu0 0
        %395 = vmatprep.subr.bf16.mxu0 0
        %396 = vmatpush2.bf16.msra.mxu0 0
        %397 = vmatprep.subr.bf16.mxu0 0
        %398 = vmatpush2.bf16.msra.mxu0 0
        %399 = vmatprep.subr.bf16.mxu0 0
        %400 = vmatpush2.bf16.msra.mxu0 0
        %401 = vmatprep.subr.bf16.mxu0 0
        %402 = vmatpush2.bf16.msra.mxu0 0
        %403 = vmatprep.subr.bf16.mxu0 0
        %404 = vmatpush2.bf16.msra.mxu0 0
        %405 = vmatprep.subr.bf16.mxu0 0
        %406 = vmatpush2.bf16.msra.mxu0 0
        %407 = vmatprep.subr.bf16.mxu0 0
        %408 = vmatpush2.bf16.msra.mxu0 0
        %409 = vmatprep.mubr.bf16.mxu0 0
        %410 = vmatmul.mubr.bf16.gmra.mxu0 %v375
        %v411 = vpop.f32.mrf.mxu0
        %v412 = vadd.f32 1e-07, %v411
        %v413 = vpop.f32.mrf.mxu0
        %v414 = vpop.f32.mrf.mxu0
        %v415 = vadd.f32 1e-07, %v414
        %v416 = vpop.f32.mrf.mxu0
        %417 = vdwg.mxu0
        %v418 = vlog2.pop %v412
        %v419 = vmul.f32 %v418, 0.6931472
        %v420 = vlog2.pop %v415
        %v421 = vmul.f32 %v420, 0.6931472
        %422 = vst [vmem:[%s185] sm:$0xff] %v419
        %423 = vst [vmem:[%s185 + $0x8] sm:$0xff] %v421
        %s424 = sand.u32 %s109, 1
        %s425 = scalar_lea.sflag [#allocation3], %s424
        %s426 = sand.u32 %s109, 1
        %s427 = smul.addr %s426, 16
        %s428 = scalar_lea.vmem [#allocation2], %s427
        // Predicated region
        $region33: #{_run.1} parent=31 // pred_check
          %p429 = pneg %p119
        $region34: #{_run.1} parent=31 // pred_check_branch
          %431 = sbr.rel (%p429) target = $region36
        $region35: #{_run.1} parent=31 // pred_region
          %s433 = ssub.s32 256, 256
          %434 = vsyncadd %s425, %s433
          %s435 = smul.addr %s21, 2
          %s436 = sadd.s32 %s22, %s435
          %s437 = smul.addr %s436, 128
          %s438 = scalar_lea.hbm %s3, %s437
          %s439 = sshll.u32 %s428, 4
          %s440 = int_to_ptr.vmem [resolvable:$true] %s439
          %445 = dma.vmem_to_hbm [thread:$0]  %s440, 256, %s438, %s425, 128, 128, 8
        $region36: #{_run.1} parent=31 // pred_fallthru
          _
      $region32: #{_run.1} parent=5 // pred_fallthru
        _
      %p446 = scmp.le.s32.totalorder 2, %s12
      // Predicated region
      $region37: #{_run.1} parent=5 // pred_check
        %p447 = pneg %p446
      $region38: #{_run.1} parent=5 // pred_check_branch
        %449 = sbr.rel (%p447) target = $region40
      $region39: #{_run.1} parent=5 // pred_region
        %s450 = ssub.s32 %s12, 2
        // Predicated region
        $region41: #{_run.1} parent=39 // pred_check
          %p451 = pneg %p125
        $region42: #{_run.1} parent=39 // pred_check_branch
          %453 = sbr.rel (%p451) target = $region44
        $region43: #{_run.1} parent=39 // pred_region
          %s454 = sand.u32 %s110, 1
          %s455 = scalar_lea.sflag [#allocation3], %s454
          %s456 = sand.u32 %s110, 1
          %s457 = smul.addr %s456, 16
          %s458 = scalar_lea.vmem [#allocation2], %s457
          %459 = dma.done %s455, 256
        $region44: #{_run.1} parent=39 // pred_fallthru
          _
      $region40: #{_run.1} parent=5 // pred_fallthru
        _
    $region6: #{_run.1} parent=1 // loop_footer
      %s16 = sadd.s32 1, %s12
    $region7: #{_run.1} parent=1 // loop_footer_branch
      %11 = sbr.rel target = $region3
    $region8: #{_run.1} parent=1 // loop_exit
      _
    %460 = vsyncpa [#allocation3], 1
    %s461 = scalar_lea.sflag [#allocation3], 1
    %462 = vsyncpa %s461, 1

</llo_original>
